<compile_context>
chip_gen: v5e
topology: v5e:2x2
jax: 0.10.0
libtpu: 0.0.40
codegen_flags: <defaults>
</compile_context>

<pallas_src>
import functools
import math

import jax
import jax.numpy as jnp
from jax.experimental import pallas as pl
from jax.experimental.pallas import tpu as pltpu


def _attention_kernel(q_ref, k_ref, v_ref, mask_ref, o_ref,
                      m_sc, l_sc, acc_sc, *, sm_scale):
    """One (batch, q_tile) output block, iterated over kv tiles (innermost grid axis)."""
    ki = pl.program_id(2)

    @pl.when(ki == 0)
    def _init():
        m_sc[...] = jnp.full_like(m_sc, -jnp.inf)
        l_sc[...] = jnp.zeros_like(l_sc)
        acc_sc[...] = jnp.zeros_like(acc_sc)

    # (1, tq, dk) x (1, tk, dk) -> (1, tq, tk) on the MXU, f32 accumulation.
    s = jnp.einsum("bqd,bkd->bqk", q_ref[...], k_ref[...],
                   preferred_element_type=jnp.float32)
    s = s * sm_scale
    # Same masking convention as the PyTorch module: (1 - mask) * -1e30 + logits
    s = s + (1.0 - mask_ref[...].astype(jnp.float32)) * jnp.float32(-1e30)

    # Online softmax update.
    m_prev = m_sc[...]
    m_new = jnp.maximum(m_prev, s.max(axis=-1, keepdims=True))
    alpha = jnp.exp(m_prev - m_new)            # EUP
    p = jnp.exp(s - m_new)                     # EUP
    l_sc[...] = alpha * l_sc[...] + p.sum(axis=-1, keepdims=True)
    acc_sc[...] = alpha * acc_sc[...] + jnp.einsum(
        "bqk,bkd->bqd", p.astype(v_ref.dtype), v_ref[...],
        preferred_element_type=jnp.float32)
    m_sc[...] = m_new

    @pl.when(ki == pl.num_programs(2) - 1)
    def _finalize():
        o_ref[...] = (acc_sc[...] / l_sc[...]).astype(o_ref.dtype)


def _round_up(x, m):
    return ((x + m - 1) // m) * m


def basic_transformer_attention(query, key, value, mask=None,
                                *, q_tile=128, kv_tile=128):
    """
    query: (batch, query_len, key_hidden)
    key  : (batch, context_len, key_hidden)
    value: (batch, context_len, value_hidden)
    mask : (batch, query_len, context_len), 1 = keep, 0 = mask out (optional)
    returns: (batch, query_len, value_hidden)
    """
    batch, q_len, dk = query.shape
    _, c_len, dk2 = key.shape
    _, _, dv = value.shape
    assert dk == dk2, "query/key hidden sizes must match"
    sm_scale = 1.0 / math.sqrt(dk)

    # Tile sizes: 128 for real shapes (MXU-aligned), clamp+round for toy shapes.
    tq = q_tile if q_len >= q_tile else _round_up(q_len, 8)
    tk = kv_tile if c_len >= kv_tile else _round_up(c_len, 8)
    q_pad = _round_up(q_len, tq)
    c_pad = _round_up(c_len, tk)

    if mask is None:
        mask = jnp.ones((batch, q_len, c_len), dtype=jnp.float32)
    mask = mask.astype(jnp.float32)

    # Pad lengths up to tile multiples. Padded context columns get mask=0
    # (-> ~0 probability); padded query rows are sliced off below.
    qp = jnp.pad(query, ((0, 0), (0, q_pad - q_len), (0, 0)))
    kp = jnp.pad(key, ((0, 0), (0, c_pad - c_len), (0, 0)))
    vp = jnp.pad(value, ((0, 0), (0, c_pad - c_len), (0, 0)))
    mp = jnp.pad(mask, ((0, 0), (0, q_pad - q_len), (0, c_pad - c_len)),
                 constant_values=0.0)

    grid = (batch, q_pad // tq, c_pad // tk)

    out = pl.pallas_call(
        functools.partial(_attention_kernel, sm_scale=sm_scale),
        out_shape=jax.ShapeDtypeStruct((batch, q_pad, dv), query.dtype),
        grid_spec=pltpu.PrefetchScalarGridSpec(
            num_scalar_prefetch=0,
            grid=grid,
            in_specs=[
                pl.BlockSpec((1, tq, dk), lambda b, qi, ki: (b, qi, 0)),   # Q
                pl.BlockSpec((1, tk, dk), lambda b, qi, ki: (b, ki, 0)),   # K
                pl.BlockSpec((1, tk, dv), lambda b, qi, ki: (b, ki, 0)),   # V
                pl.BlockSpec((1, tq, tk), lambda b, qi, ki: (b, qi, ki)),  # mask
            ],
            out_specs=pl.BlockSpec((1, tq, dv), lambda b, qi, ki: (b, qi, 0)),
            scratch_shapes=[
                pltpu.VMEM((1, tq, 1), jnp.float32),   # running max m
                pltpu.VMEM((1, tq, 1), jnp.float32),   # running denom l
                pltpu.VMEM((1, tq, dv), jnp.float32),  # output accumulator
            ],
        ),
        compiler_params=pltpu.CompilerParams(
            # kv (reduction) axis last + "arbitrary"; batch / q tiles shard
            # across TensorCores. VMEM use at 128-tiles is tiny, so the scoped
            # default (16/32 MiB) is plenty on v5e/v6e/v7x - no limit bump needed.
            dimension_semantics=("parallel", "parallel", "arbitrary")),
    )(qp, kp, vp, mp)

    return out[:, :q_len, :]


if __name__ == "__main__":
    rng = jax.random.PRNGKey(0)
    batch, q_len, c_len = 2, 8, 8
    key_hidden, value_hidden = 32, 32

    kq, kk, kv, km = jax.random.split(rng, 4)
    q = jax.random.normal(kq, (batch, q_len, key_hidden), jnp.float32)
    k = jax.random.normal(kk, (batch, c_len, key_hidden), jnp.float32)
    v = jax.random.normal(kv, (batch, c_len, value_hidden), jnp.float32)
    mask = (jax.random.uniform(km, (batch, q_len, c_len)) > 0.3).astype(jnp.float32)
    mask = mask.at[:, :, 0].set(1.0)  # keep at least one real key per query row

    out = basic_transformer_attention(q, k, v, mask)
    out = jax.block_until_ready(out)

    # Reference (plain JAX, mirrors the PyTorch module exactly).
    hp = jax.lax.Precision.HIGHEST
    logits = jnp.einsum("bqd,bkd->bqk", q, k, precision=hp) / math.sqrt(key_hidden)
    logits = (1.0 - mask) * (-1e30) + logits
    ref = jnp.einsum("bqk,bkd->bqd", jax.nn.softmax(logits, axis=-1), v, precision=hp)

    assert out.shape == (batch, q_len, value_hidden)
    assert jnp.allclose(out, ref, atol=1e-4, rtol=1e-4)

    # mask=None path (no masking, same as passing all-ones)
    out2 = jax.block_until_ready(basic_transformer_attention(q, k, v, None))
    logits2 = jnp.einsum("bqd,bkd->bqk", q, k, precision=hp) / math.sqrt(key_hidden)
    ref2 = jnp.einsum("bqk,bkd->bqd", jax.nn.softmax(logits2, axis=-1), v, precision=hp)
    assert jnp.allclose(out2, ref2, atol=1e-4, rtol=1e-4)

    print("KERNEL_OK")
</pallas_src>

<mosaic_0001>
module attributes {stable_mosaic.version = 11 : i64} {
  func.func @_attention_kernel(%arg0: i32, %arg1: i32, %arg2: i32, %arg3: memref<1x8x32xf32, #tpu.memory_space<vmem>>, %arg4: memref<1x8x32xf32, #tpu.memory_space<vmem>>, %arg5: memref<1x8x32xf32, #tpu.memory_space<vmem>>, %arg6: memref<1x8x8xf32, #tpu.memory_space<vmem>>, %arg7: memref<1x8x32xf32, #tpu.memory_space<vmem>>, %arg8: memref<1x8x1xf32, #tpu.memory_space<vmem>>, %arg9: memref<1x8x1xf32, #tpu.memory_space<vmem>>, %arg10: memref<1x8x32xf32, #tpu.memory_space<vmem>>) attributes {dimension_semantics = [#tpu.dimension_semantics<parallel>, #tpu.dimension_semantics<parallel>, #tpu.dimension_semantics<arbitrary>], iteration_bounds = array<i64: 2, 1, 1>, scalar_prefetch = 0 : i64, scratch_operands = 3 : i64, tpu.core_type = #tpu.core_type<tc>, window_params = [{transform_indices = @transform_0, window_bounds = array<i64: 1, 8, 32>}, {transform_indices = @transform_1, window_bounds = array<i64: 1, 8, 32>}, {transform_indices = @transform_2, window_bounds = array<i64: 1, 8, 32>}, {transform_indices = @transform_3, window_bounds = array<i64: 1, 8, 8>}, {transform_indices = @transform_4, window_bounds = array<i64: 1, 8, 32>}]} {
    %c0_i32 = arith.constant 0 : i32
    %0 = arith.cmpi eq, %arg2, %c0_i32 : i32
    %1 = arith.extui %0 : i1 to i32
    %c0_i32_0 = arith.constant 0 : i32
    %2 = arith.cmpi ne, %1, %c0_i32_0 : i32
    scf.if %2 {
      %cst_38 = arith.constant 0xFF800000 : f32
      %40 = vector.broadcast %cst_38 : f32 to vector<1x8x1xf32>
      %c0_39 = arith.constant 0 : index
      %c0_40 = arith.constant 0 : index
      %c0_41 = arith.constant 0 : index
      %41 = vector.load %arg8[%c0_39, %c0_40, %c0_41] : memref<1x8x1xf32, #tpu.memory_space<vmem>>, vector<1x8x1xf32>
      tpu.vector_store %arg8[%c0_39, %c0_40, %c0_41], %40 {strides = array<i32>} : memref<1x8x1xf32, #tpu.memory_space<vmem>>, vector<1x8x1xf32>,
      %cst_42 = arith.constant 0.000000e+00 : f32
      %42 = vector.broadcast %cst_42 : f32 to vector<1x8x1xf32>
      %c0_43 = arith.constant 0 : index
      %c0_44 = arith.constant 0 : index
      %c0_45 = arith.constant 0 : index
      %43 = vector.load %arg9[%c0_43, %c0_44, %c0_45] : memref<1x8x1xf32, #tpu.memory_space<vmem>>, vector<1x8x1xf32>
      tpu.vector_store %arg9[%c0_43, %c0_44, %c0_45], %42 {strides = array<i32>} : memref<1x8x1xf32, #tpu.memory_space<vmem>>, vector<1x8x1xf32>,
      %cst_46 = arith.constant 0.000000e+00 : f32
      %44 = vector.broadcast %cst_46 : f32 to vector<1x8x32xf32>
      %c0_47 = arith.constant 0 : index
      %c0_48 = arith.constant 0 : index
      %c0_49 = arith.constant 0 : index
      %45 = vector.load %arg10[%c0_47, %c0_48, %c0_49] : memref<1x8x32xf32, #tpu.memory_space<vmem>>, vector<1x8x32xf32>
      tpu.vector_store %arg10[%c0_47, %c0_48, %c0_49], %44 {strides = array<i32>} : memref<1x8x32xf32, #tpu.memory_space<vmem>>, vector<1x8x32xf32>,
    } else {
    }
    %c0 = arith.constant 0 : index
    %c0_1 = arith.constant 0 : index
    %c0_2 = arith.constant 0 : index
    %3 = vector.load %arg3[%c0, %c0_1, %c0_2] : memref<1x8x32xf32, #tpu.memory_space<vmem>>, vector<1x8x32xf32>
    %c0_3 = arith.constant 0 : index
    %c0_4 = arith.constant 0 : index
    %c0_5 = arith.constant 0 : index
    %4 = vector.load %arg4[%c0_3, %c0_4, %c0_5] : memref<1x8x32xf32, #tpu.memory_space<vmem>>, vector<1x8x32xf32>
    "tpu.trace_start"() <{level = 10 : i32, message = "bqd,bkd->bqk"}> : () -> ()
    %cst = arith.constant dense<0.000000e+00> : vector<1x8x8xf32>
    %5 = tpu.matmul %3, %4, %cst {dimension_numbers = #tpu.dot_dimension_numbers<[2], [2], [1], [1], [0, 0, 0, 1, 1, 1], [0], [0]>} : vector<1x8x32xf32>, vector<1x8x32xf32>, vector<1x8x8xf32> -> vector<1x8x8xf32>
    "tpu.trace_stop"() : () -> ()
    %cst_6 = arith.constant 0.176776692 : f32
    %6 = vector.broadcast %cst_6 : f32 to vector<1x8x8xf32>
    %7 = arith.mulf %5, %6 : vector<1x8x8xf32>
    %c0_7 = arith.constant 0 : index
    %c0_8 = arith.constant 0 : index
    %c0_9 = arith.constant 0 : index
    %8 = vector.load %arg6[%c0_7, %c0_8, %c0_9] : memref<1x8x8xf32, #tpu.memory_space<vmem>>, vector<1x8x8xf32>
    %cst_10 = arith.constant 1.000000e+00 : f32
    %9 = vector.broadcast %cst_10 : f32 to vector<1x8x8xf32>
    %10 = arith.subf %9, %8 : vector<1x8x8xf32>
    %cst_11 = arith.constant -1.000000e+30 : f32
    %11 = vector.broadcast %cst_11 : f32 to vector<1x8x8xf32>
    %12 = arith.mulf %10, %11 : vector<1x8x8xf32>
    %13 = arith.addf %7, %12 : vector<1x8x8xf32>
    %c0_12 = arith.constant 0 : index
    %c0_13 = arith.constant 0 : index
    %c0_14 = arith.constant 0 : index
    %14 = vector.load %arg8[%c0_12, %c0_13, %c0_14] : memref<1x8x1xf32, #tpu.memory_space<vmem>>, vector<1x8x1xf32>
    %cst_15 = arith.constant dense<0xFF800000> : vector<1x8xf32>
    %15 = vector.multi_reduction <maximumf>, %13, %cst_15 [2] : vector<1x8x8xf32> to vector<1x8xf32>
    %16 = vector.shape_cast %15 : vector<1x8xf32> to vector<1x8x1xf32>
    %17 = arith.maximumf %14, %16 : vector<1x8x1xf32>
    %18 = arith.subf %14, %17 : vector<1x8x1xf32>
    %19 = math.exp %18 : vector<1x8x1xf32>
    %20 = vector.broadcast %17 : vector<1x8x1xf32> to vector<1x8x8xf32>
    %21 = arith.subf %13, %20 : vector<1x8x8xf32>
    %22 = math.exp %21 : vector<1x8x8xf32>
    %c0_16 = arith.constant 0 : index
    %c0_17 = arith.constant 0 : index
    %c0_18 = arith.constant 0 : index
    %23 = vector.load %arg9[%c0_16, %c0_17, %c0_18] : memref<1x8x1xf32, #tpu.memory_space<vmem>>, vector<1x8x1xf32>
    %24 = arith.mulf %19, %23 : vector<1x8x1xf32>
    %cst_19 = arith.constant dense<0.000000e+00> : vector<1x8xf32>
    %25 = vector.multi_reduction <add>, %22, %cst_19 [2] : vector<1x8x8xf32> to vector<1x8xf32>
    %26 = vector.shape_cast %25 : vector<1x8xf32> to vector<1x8x1xf32>
    %27 = arith.addf %24, %26 : vector<1x8x1xf32>
    %c0_20 = arith.constant 0 : index
    %c0_21 = arith.constant 0 : index
    %c0_22 = arith.constant 0 : index
    %28 = vector.load %arg9[%c0_20, %c0_21, %c0_22] : memref<1x8x1xf32, #tpu.memory_space<vmem>>, vector<1x8x1xf32>
    tpu.vector_store %arg9[%c0_20, %c0_21, %c0_22], %27 {strides = array<i32>} : memref<1x8x1xf32, #tpu.memory_space<vmem>>, vector<1x8x1xf32>,
    %c0_23 = arith.constant 0 : index
    %c0_24 = arith.constant 0 : index
    %c0_25 = arith.constant 0 : index
    %29 = vector.load %arg10[%c0_23, %c0_24, %c0_25] : memref<1x8x32xf32, #tpu.memory_space<vmem>>, vector<1x8x32xf32>
    %30 = vector.broadcast %19 : vector<1x8x1xf32> to vector<1x8x32xf32>
    %31 = arith.mulf %30, %29 : vector<1x8x32xf32>
    %c0_26 = arith.constant 0 : index
    %c0_27 = arith.constant 0 : index
    %c0_28 = arith.constant 0 : index
    %32 = vector.load %arg5[%c0_26, %c0_27, %c0_28] : memref<1x8x32xf32, #tpu.memory_space<vmem>>, vector<1x8x32xf32>
    "tpu.trace_start"() <{level = 10 : i32, message = "bqk,bkd->bqd"}> : () -> ()
    %cst_29 = arith.constant dense<0.000000e+00> : vector<1x8x32xf32>
    %33 = tpu.matmul %22, %32, %cst_29 {dimension_numbers = #tpu.dot_dimension_numbers<[2], [1], [1], [2], [0, 0, 0, 1, 1, 2], [0], [0]>} : vector<1x8x8xf32>, vector<1x8x32xf32>, vector<1x8x32xf32> -> vector<1x8x32xf32>
    "tpu.trace_stop"() : () -> ()
    %34 = arith.addf %31, %33 : vector<1x8x32xf32>
    %c0_30 = arith.constant 0 : index
    %c0_31 = arith.constant 0 : index
    %c0_32 = arith.constant 0 : index
    %35 = vector.load %arg10[%c0_30, %c0_31, %c0_32] : memref<1x8x32xf32, #tpu.memory_space<vmem>>, vector<1x8x32xf32>
    tpu.vector_store %arg10[%c0_30, %c0_31, %c0_32], %34 {strides = array<i32>} : memref<1x8x32xf32, #tpu.memory_space<vmem>>, vector<1x8x32xf32>,
    %c0_33 = arith.constant 0 : index
    %c0_34 = arith.constant 0 : index
    %c0_35 = arith.constant 0 : index
    %36 = vector.load %arg8[%c0_33, %c0_34, %c0_35] : memref<1x8x1xf32, #tpu.memory_space<vmem>>, vector<1x8x1xf32>
    tpu.vector_store %arg8[%c0_33, %c0_34, %c0_35], %17 {strides = array<i32>} : memref<1x8x1xf32, #tpu.memory_space<vmem>>, vector<1x8x1xf32>,
    %c0_i32_36 = arith.constant 0 : i32
    %37 = arith.cmpi eq, %arg2, %c0_i32_36 : i32
    %38 = arith.extui %37 : i1 to i32
    %c0_i32_37 = arith.constant 0 : i32
    %39 = arith.cmpi ne, %38, %c0_i32_37 : i32
    scf.if %39 {
      %c0_38 = arith.constant 0 : index
      %c0_39 = arith.constant 0 : index
      %c0_40 = arith.constant 0 : index
      %40 = vector.load %arg10[%c0_38, %c0_39, %c0_40] : memref<1x8x32xf32, #tpu.memory_space<vmem>>, vector<1x8x32xf32>
      %c0_41 = arith.constant 0 : index
      %c0_42 = arith.constant 0 : index
      %c0_43 = arith.constant 0 : index
      %41 = vector.load %arg9[%c0_41, %c0_42, %c0_43] : memref<1x8x1xf32, #tpu.memory_space<vmem>>, vector<1x8x1xf32>
      %42 = vector.broadcast %41 : vector<1x8x1xf32> to vector<1x8x32xf32>
      %43 = arith.divf %40, %42 : vector<1x8x32xf32>
      %c0_44 = arith.constant 0 : index
      %c0_45 = arith.constant 0 : index
      %c0_46 = arith.constant 0 : index
      %44 = vector.load %arg7[%c0_44, %c0_45, %c0_46] : memref<1x8x32xf32, #tpu.memory_space<vmem>>, vector<1x8x32xf32>
      tpu.vector_store %arg7[%c0_44, %c0_45, %c0_46], %43 {strides = array<i32>} : memref<1x8x32xf32, #tpu.memory_space<vmem>>, vector<1x8x32xf32>,
    } else {
    }
    return
  }
  func.func @transform_0(%arg0: i32, %arg1: i32, %arg2: i32) -> (i32, i32, i32) {
    %c0_i32 = arith.constant 0 : i32
    %c0_i32_0 = arith.constant 0 : i32
    return %arg0, %arg1, %c0_i32 : i32, i32, i32
  }
  func.func @transform_1(%arg0: i32, %arg1: i32, %arg2: i32) -> (i32, i32, i32) {
    %c0_i32 = arith.constant 0 : i32
    %c0_i32_0 = arith.constant 0 : i32
    return %arg0, %arg2, %c0_i32 : i32, i32, i32
  }
  func.func @transform_2(%arg0: i32, %arg1: i32, %arg2: i32) -> (i32, i32, i32) {
    %c0_i32 = arith.constant 0 : i32
    %c0_i32_0 = arith.constant 0 : i32
    return %arg0, %arg2, %c0_i32 : i32, i32, i32
  }
  func.func @transform_3(%arg0: i32, %arg1: i32, %arg2: i32) -> (i32, i32, i32) {
    %c0_i32 = arith.constant 0 : i32
    return %arg0, %arg1, %arg2 : i32, i32, i32
  }
  func.func @transform_4(%arg0: i32, %arg1: i32, %arg2: i32) -> (i32, i32, i32) {
    %c0_i32 = arith.constant 0 : i32
    %c0_i32_0 = arith.constant 0 : i32
    return %arg0, %arg1, %c0_i32 : i32, i32, i32
  }
}

</mosaic_0001>

<llo_original>
// kernel: tpu_custom_call.1
$region0: #{tpu_custom_call.1}
  #allocation0 [shape = 'u32[]', space=smem, size = 0x4, offset = 0x4, fixed_abs, tag = 'smem constant byte address 0x4 - core index']
  #allocation1 [shape = 'u32[72,128]{1,0:T(1,128)}', space=vmem, size = 0x9000, scoped, tag = 'internal scratch']
  #allocation2 [shape = 'f32[1,8,1]{2,1,0:T(8,128)}', space=vmem, size = 0x1000, scoped, tag = 'scratch operand']
  #allocation3 [shape = 'f32[1,8,1]{2,1,0:T(8,128)}', space=vmem, size = 0x1000, scoped, tag = 'scratch operand']
  #allocation4 [shape = 'f32[1,8,32]{2,1,0:T(8,128)}', space=vmem, size = 0x1000, scoped, tag = 'scratch operand']
  %s0 = inlined_call_operand.hbm [shape: f32[2,8,32], index: 0, kind: input, shape index: {}]
  %s1 = inlined_call_operand.hbm [shape: f32[2,8,32], index: 1, kind: input, shape index: {}]
  %s2 = inlined_call_operand.hbm [shape: f32[2,8,32], index: 2, kind: input, shape index: {}]
  %s3 = inlined_call_operand.hbm [shape: f32[2,8,8], index: 3, kind: input, shape index: {}]
  %s4 = inlined_call_operand.hbm [shape: f32[2,8,32], index: 4, kind: output, shape index: {}]
  %s5 = sld [smem:[#allocation0]]
  $region73: #{tpu_custom_call.1} parent=0
    _
  %s7 = ssub.s32 1, %s5
  %s8 = scalar_select 0, %s7, %s5
  $region1: #{tpu_custom_call.1} parent=0
    #allocation5 [shape = 'u8[8192]{0}', space=vmem, size = 0x2000, scoped, tag = 'input window, operand 0']
    #allocation6 [shape = 's32[2]{0}', space=sflag, size = 0x8, scoped, tag = 'scoped memory for tpu_custom_call.1']
    #allocation7 [shape = 's32[2]{0}', space=sflag, size = 0x8, scoped, tag = 'scoped memory for tpu_custom_call.1']
    #allocation8 [shape = 'u8[8192]{0}', space=vmem, size = 0x2000, scoped, tag = 'input window, operand 1']
    #allocation9 [shape = 's32[2]{0}', space=sflag, size = 0x8, scoped, tag = 'scoped memory for tpu_custom_call.1']
    #allocation10 [shape = 'u8[8192]{0}', space=vmem, size = 0x2000, scoped, tag = 'input window, operand 2']
    #allocation11 [shape = 'u8[8192]{0}', space=vmem, size = 0x2000, scoped, tag = 'input window, operand 3']
    #allocation12 [shape = 's32[2]{0}', space=sflag, size = 0x8, scoped, tag = 'scoped memory for tpu_custom_call.1']
    #allocation13 [shape = 'u8[8192]{0}', space=vmem, size = 0x2000, scoped, tag = 'output window, operand 0']
    %9 = vsyncpa [#allocation6], 0
    %s10 = scalar_lea.sflag [#allocation6], 1
    %11 = vsyncpa %s10, 0
    %12 = vsyncpa [#allocation9], 0
    %s13 = scalar_lea.sflag [#allocation9], 1
    %14 = vsyncpa %s13, 0
    %15 = vsyncpa [#allocation12], 0
    %s16 = scalar_lea.sflag [#allocation12], 1
    %17 = vsyncpa %s16, 0
    %18 = vsyncpa [#allocation7], 0
    %s19 = scalar_lea.sflag [#allocation7], 1
    %20 = vsyncpa %s19, 0
    loop: start=0, step=1, limit=4
    $region2: #{tpu_custom_call.1} parent=1 // loop_pre_header
      _
    $region3: #{tpu_custom_call.1} parent=1 // loop_header
      %s22 = sphi 0, %s26
      %p23 = scmp.ge.s32.totalorder %s22, 4
      %s29 = sphi 0, %s48
      %s30 = sphi 0, %s44
      %s31 = sphi 0, %s40
      %s32 = sphi 0, %s29
      %s33 = sphi 0, %s30
      %s34 = sphi 0, %s31
      %s35 = sphi 0, %s32
      %s36 = sphi 0, %s33
      %s37 = sphi 0, %s34
      %s53 = sphi 0, %s55
      %s56 = sphi 0, %s53
      %s57 = sphi 0, %s56
      %s73 = sphi 0, %s57
      %s81 = sphi 0, %s83
      %s84 = sphi 0, %s81
      %s85 = sphi 0, %s84
      %s101 = sphi 0, %s85
      %s109 = sphi 0, %s111
      %s112 = sphi 0, %s109
      %s113 = sphi 0, %s112
      %s129 = sphi 0, %s113
      %s139 = sphi 0, %s141
      %s142 = sphi 0, %s139
      %s143 = sphi 0, %s142
      %s159 = sphi 0, %s143
      %s167 = sphi 0, %s169
      %s170 = sphi 0, %s167
      %s171 = sphi 0, %s170
      %s187 = sphi 0, %s171
    $region4: #{tpu_custom_call.1} parent=1 // loop_header_branch
      %25 = sbr.rel (%p23) target = $region8
    $region5: #{tpu_custom_call.1} parent=1 // loop_body
      %s27 = ssub.s32 %s22, 1
      %s28 = ssub.s32 %s22, 2
      %s38 = sadd.s32 1, %s31
      %p39 = scmp.ge.s32.totalorder %s38, 1
      %s40 = scalar_select %p39, 0, %s38
      %s41 = sadd.s32 1, %s30
      %s42 = scalar_select %p39, %s41, %s30
      %p43 = scmp.ge.s32.totalorder %s42, 1
      %s44 = scalar_select %p43, 0, %s42
      %s45 = sadd.s32 1, %s29
      %s46 = scalar_select %p43, %s45, %s29
      %p47 = scmp.ge.s32.totalorder %s46, 2
      %s48 = scalar_select %p47, 0, %s46
      %s49 = ssub.s32 %s29, %s48
      %s50 = ssub.s32 %s30, %s44
      %s51 = sor.u32 %s49, %s50
      %p52 = scmp.eq.s32.totalorder %s51, 0
      %s54 = sadd.s32 %s53, 1
      %s55 = scalar_select %p52, %s53, %s54
      %p58 = pneg %p52
      %p59 = scmp.eq.s32.totalorder %s22, 1
      %p60 = por %p58, %p59
      %p61 = scmp.ne.s32.totalorder %s53, %s56
      %p62 = scmp.eq.s32.totalorder %s22, 0
      %p63 = por %p61, %p62
      %p64 = scmp.ne.s32.totalorder %s53, %s56
      %p65 = scmp.eq.s32.totalorder %s27, 1
      %p66 = por %p64, %p65
      %p67 = scmp.ne.s32.totalorder %s56, %s57
      %p68 = scmp.eq.s32.totalorder %s27, 0
      %p69 = por %p67, %p68
      %p70 = scmp.ne.s32.totalorder %s56, %s57
      %p71 = scmp.eq.s32.totalorder %s28, 1
      %p72 = por %p70, %p71
      %p74 = scmp.ne.s32.totalorder %s57, %s73
      %p75 = scmp.eq.s32.totalorder %s28, 0
      %p76 = por %p74, %p75
      %s77 = ssub.s32 %s29, %s48
      %s78 = ssub.s32 %s31, %s40
      %s79 = sor.u32 %s77, %s78
      %p80 = scmp.eq.s32.totalorder %s79, 0
      %s82 = sadd.s32 %s81, 1
      %s83 = scalar_select %p80, %s81, %s82
      %p86 = pneg %p80
      %p87 = scmp.eq.s32.totalorder %s22, 1
      %p88 = por %p86, %p87
      %p89 = scmp.ne.s32.totalorder %s81, %s84
      %p90 = scmp.eq.s32.totalorder %s22, 0
      %p91 = por %p89, %p90
      %p92 = scmp.ne.s32.totalorder %s81, %s84
      %p93 = scmp.eq.s32.totalorder %s27, 1
      %p94 = por %p92, %p93
      %p95 = scmp.ne.s32.totalorder %s84, %s85
      %p96 = scmp.eq.s32.totalorder %s27, 0
      %p97 = por %p95, %p96
      %p98 = scmp.ne.s32.totalorder %s84, %s85
      %p99 = scmp.eq.s32.totalorder %s28, 1
      %p100 = por %p98, %p99
      %p102 = scmp.ne.s32.totalorder %s85, %s101
      %p103 = scmp.eq.s32.totalorder %s28, 0
      %p104 = por %p102, %p103
      %s105 = ssub.s32 %s29, %s48
      %s106 = ssub.s32 %s31, %s40
      %s107 = sor.u32 %s105, %s106
      %p108 = scmp.eq.s32.totalorder %s107, 0
      %s110 = sadd.s32 %s109, 1
      %s111 = scalar_select %p108, %s109, %s110
      %p114 = pneg %p108
      %p115 = scmp.eq.s32.totalorder %s22, 1
      %p116 = por %p114, %p115
      %p117 = scmp.ne.s32.totalorder %s109, %s112
      %p118 = scmp.eq.s32.totalorder %s22, 0
      %p119 = por %p117, %p118
      %p120 = scmp.ne.s32.totalorder %s109, %s112
      %p121 = scmp.eq.s32.totalorder %s27, 1
      %p122 = por %p120, %p121
      %p123 = scmp.ne.s32.totalorder %s112, %s113
      %p124 = scmp.eq.s32.totalorder %s27, 0
      %p125 = por %p123, %p124
      %p126 = scmp.ne.s32.totalorder %s112, %s113
      %p127 = scmp.eq.s32.totalorder %s28, 1
      %p128 = por %p126, %p127
      %p130 = scmp.ne.s32.totalorder %s113, %s129
      %p131 = scmp.eq.s32.totalorder %s28, 0
      %p132 = por %p130, %p131
      %s133 = ssub.s32 %s29, %s48
      %s134 = ssub.s32 %s30, %s44
      %s135 = sor.u32 %s133, %s134
      %s136 = ssub.s32 %s31, %s40
      %s137 = sor.u32 %s135, %s136
      %p138 = scmp.eq.s32.totalorder %s137, 0
      %s140 = sadd.s32 %s139, 1
      %s141 = scalar_select %p138, %s139, %s140
      %p144 = pneg %p138
      %p145 = scmp.eq.s32.totalorder %s22, 1
      %p146 = por %p144, %p145
      %p147 = scmp.ne.s32.totalorder %s139, %s142
      %p148 = scmp.eq.s32.totalorder %s22, 0
      %p149 = por %p147, %p148
      %p150 = scmp.ne.s32.totalorder %s139, %s142
      %p151 = scmp.eq.s32.totalorder %s27, 1
      %p152 = por %p150, %p151
      %p153 = scmp.ne.s32.totalorder %s142, %s143
      %p154 = scmp.eq.s32.totalorder %s27, 0
      %p155 = por %p153, %p154
      %p156 = scmp.ne.s32.totalorder %s142, %s143
      %p157 = scmp.eq.s32.totalorder %s28, 1
      %p158 = por %p156, %p157
      %p160 = scmp.ne.s32.totalorder %s143, %s159
      %p161 = scmp.eq.s32.totalorder %s28, 0
      %p162 = por %p160, %p161
      %s163 = ssub.s32 %s29, %s48
      %s164 = ssub.s32 %s30, %s44
      %s165 = sor.u32 %s163, %s164
      %p166 = scmp.eq.s32.totalorder %s165, 0
      %s168 = sadd.s32 %s167, 1
      %s169 = scalar_select %p166, %s167, %s168
      %p172 = pneg %p166
      %p173 = scmp.eq.s32.totalorder %s22, 1
      %p174 = por %p172, %p173
      %p175 = scmp.ne.s32.totalorder %s167, %s170
      %p176 = scmp.eq.s32.totalorder %s22, 0
      %p177 = por %p175, %p176
      %p178 = scmp.ne.s32.totalorder %s167, %s170
      %p179 = scmp.eq.s32.totalorder %s27, 1
      %p180 = por %p178, %p179
      %p181 = scmp.ne.s32.totalorder %s170, %s171
      %p182 = scmp.eq.s32.totalorder %s27, 0
      %p183 = por %p181, %p182
      %p184 = scmp.ne.s32.totalorder %s170, %s171
      %p185 = scmp.eq.s32.totalorder %s28, 1
      %p186 = por %p184, %p185
      %p188 = scmp.ne.s32.totalorder %s171, %s187
      %p189 = scmp.eq.s32.totalorder %s28, 0
      %p190 = por %p188, %p189
      %p191 = scmp.le.s32.totalorder 1, %s22
      %p192 = scmp.lt.s32.totalorder %s22, 3
      %p193 = pnand %p191, %p192
      %p194 = pneg %p193
      // Predicated region
      $region9: #{tpu_custom_call.1} parent=5 // pred_check
        _
      $region10: #{tpu_custom_call.1} parent=5 // pred_check_branch
        %196 = sbr.rel (%p193) target = $region12
      $region11: #{tpu_custom_call.1} parent=5 // pred_region
        %s197 = ssub.s32 %s22, 1
      $region12: #{tpu_custom_call.1} parent=5 // pred_fallthru
        _
      %p198 = scmp.lt.s32.totalorder %s22, 2
      // Predicated region
      $region13: #{tpu_custom_call.1} parent=5 // pred_check
        %p199 = pneg %p198
      $region14: #{tpu_custom_call.1} parent=5 // pred_check_branch
        %201 = sbr.rel (%p199) target = $region16
      $region15: #{tpu_custom_call.1} parent=5 // pred_region
        // Predicated region
        $region17: #{tpu_custom_call.1} parent=15 // pred_check
          %p202 = pneg %p63
        $region18: #{tpu_custom_call.1} parent=15 // pred_check_branch
          %204 = sbr.rel (%p202) target = $region20
        $region19: #{tpu_custom_call.1} parent=15 // pred_region
          %s205 = sand.u32 %s53, 1
          %s206 = scalar_lea.sflag [#allocation6], %s205
          %s207 = sand.u32 %s53, 1
          %s208 = smul.addr %s207, 8
          %s209 = scalar_lea.vmem [#allocation5], %s208
          %211 = vsyncadd %s206, 0
          %s212 = sadd.s32 %s30, %s29
          %s213 = smul.addr %s212, 8
          %s214 = scalar_lea.hbm %s0, %s213
          %s216 = sshll.u32 %s214, 4
          %s217 = int_to_ptr.hbm [resolvable:$true] %s216
          %s218 = sshll.u32 %s209, 4
          %s219 = int_to_ptr.vmem [resolvable:$true] %s218
          %221 = dma.hbm_to_vmem [thread:$0]  %s217, 128, %s219, %s206
        $region20: #{tpu_custom_call.1} parent=15 // pred_fallthru
          _
        // Predicated region
        $region21: #{tpu_custom_call.1} parent=15 // pred_check
          %p222 = pneg %p91
        $region22: #{tpu_custom_call.1} parent=15 // pred_check_branch
          %224 = sbr.rel (%p222) target = $region24
        $region23: #{tpu_custom_call.1} parent=15 // pred_region
          %s225 = sand.u32 %s22, 1
          %s226 = scalar_lea.sflag [#allocation9], %s225
          %s227 = sand.u32 %s81, 1
          %s228 = smul.addr %s227, 8
          %s229 = scalar_lea.vmem [#allocation8], %s228
          %231 = vsyncadd %s226, 0
          %s232 = sadd.s32 %s31, %s29
          %s233 = smul.addr %s232, 8
          %s234 = scalar_lea.hbm %s1, %s233
          %s236 = sshll.u32 %s234, 4
          %s237 = int_to_ptr.hbm [resolvable:$true] %s236
          %s238 = sshll.u32 %s229, 4
          %s239 = int_to_ptr.vmem [resolvable:$true] %s238
          %241 = dma.hbm_to_vmem [thread:$0]  %s237, 128, %s239, %s226
        $region24: #{tpu_custom_call.1} parent=15 // pred_fallthru
          _
        // Predicated region
        $region25: #{tpu_custom_call.1} parent=15 // pred_check
          %p242 = pneg %p119
        $region26: #{tpu_custom_call.1} parent=15 // pred_check_branch
          %244 = sbr.rel (%p242) target = $region28
        $region27: #{tpu_custom_call.1} parent=15 // pred_region
          %s245 = sand.u32 %s22, 1
          %s246 = scalar_lea.sflag [#allocation9], %s245
          %s247 = sand.u32 %s109, 1
          %s248 = smul.addr %s247, 8
          %s249 = scalar_lea.vmem [#allocation10], %s248
          %251 = vsyncadd %s246, 0
          %s252 = sadd.s32 %s31, %s29
          %s253 = smul.addr %s252, 8
          %s254 = scalar_lea.hbm %s2, %s253
          %s256 = sshll.u32 %s254, 4
          %s257 = int_to_ptr.hbm [resolvable:$true] %s256
          %s258 = sshll.u32 %s249, 4
          %s259 = int_to_ptr.vmem [resolvable:$true] %s258
          %261 = dma.hbm_to_vmem [thread:$0]  %s257, 128, %s259, %s246
        $region28: #{tpu_custom_call.1} parent=15 // pred_fallthru
          _
        // Predicated region
        $region29: #{tpu_custom_call.1} parent=15 // pred_check
          %p262 = pneg %p149
        $region30: #{tpu_custom_call.1} parent=15 // pred_check_branch
          %264 = sbr.rel (%p262) target = $region32
        $region31: #{tpu_custom_call.1} parent=15 // pred_region
          %s265 = sand.u32 %s139, 1
          %s266 = scalar_lea.sflag [#allocation12], %s265
          %s267 = sand.u32 %s139, 1
          %s268 = smul.addr %s267, 8
          %s269 = scalar_lea.vmem [#allocation11], %s268
          %271 = vsyncadd %s266, 0
          %s272 = sadd.s32 %s31, %s30
          %s273 = sadd.s32 %s272, %s29
          %s274 = smul.addr %s273, 8
          %s275 = scalar_lea.hbm %s3, %s274
          %s277 = sshll.u32 %s275, 4
          %s278 = int_to_ptr.hbm [resolvable:$true] %s277
          %s279 = sshll.u32 %s269, 4
          %s280 = int_to_ptr.vmem [resolvable:$true] %s279
          %282 = dma.hbm_to_vmem [thread:$0]  %s278, 128, %s280, %s266
        $region32: #{tpu_custom_call.1} parent=15 // pred_fallthru
          _
      $region16: #{tpu_custom_call.1} parent=5 // pred_fallthru
        _
      %p283 = scmp.le.s32.totalorder 1, %s22
      %p284 = scmp.lt.s32.totalorder %s22, 3
      %p285 = pnand %p283, %p284
      %p286 = pneg %p285
      // Predicated region
      $region33: #{tpu_custom_call.1} parent=5 // pred_check
        _
      $region34: #{tpu_custom_call.1} parent=5 // pred_check_branch
        %288 = sbr.rel (%p285) target = $region36
      $region35: #{tpu_custom_call.1} parent=5 // pred_region
        %s289 = ssub.s32 %s22, 1
        %s290 = sand.u32 %s56, 1
        %s291 = scalar_lea.sflag [#allocation6], %s290
        %s292 = sand.u32 %s56, 1
        %s293 = smul.addr %s292, 8
        %s294 = scalar_lea.vmem [#allocation5], %s293
        // Predicated region
        $region37: #{tpu_custom_call.1} parent=35 // pred_check
          %p295 = pneg %p69
        $region38: #{tpu_custom_call.1} parent=35 // pred_check_branch
          %297 = sbr.rel (%p295) target = $region40
        $region39: #{tpu_custom_call.1} parent=35 // pred_region
          %299 = dma.done %s291, 128
        $region40: #{tpu_custom_call.1} parent=35 // pred_fallthru
          _
        %s300 = sand.u32 %s27, 1
        %s301 = scalar_lea.sflag [#allocation9], %s300
        %s302 = sand.u32 %s84, 1
        %s303 = smul.addr %s302, 8
        %s304 = scalar_lea.vmem [#allocation8], %s303
        // Predicated region
        $region41: #{tpu_custom_call.1} parent=35 // pred_check
          %p305 = pneg %p97
        $region42: #{tpu_custom_call.1} parent=35 // pred_check_branch
          %307 = sbr.rel (%p305) target = $region44
        $region43: #{tpu_custom_call.1} parent=35 // pred_region
          %309 = dma.done %s301, 128
        $region44: #{tpu_custom_call.1} parent=35 // pred_fallthru
          _
        %s310 = sand.u32 %s27, 1
        %s311 = scalar_lea.sflag [#allocation9], %s310
        %s312 = sand.u32 %s112, 1
        %s313 = smul.addr %s312, 8
        %s314 = scalar_lea.vmem [#allocation10], %s313
        // Predicated region
        $region45: #{tpu_custom_call.1} parent=35 // pred_check
          %p315 = pneg %p125
        $region46: #{tpu_custom_call.1} parent=35 // pred_check_branch
          %317 = sbr.rel (%p315) target = $region48
        $region47: #{tpu_custom_call.1} parent=35 // pred_region
          %319 = dma.done %s311, 128
        $region48: #{tpu_custom_call.1} parent=35 // pred_fallthru
          _
        %s320 = sand.u32 %s142, 1
        %s321 = scalar_lea.sflag [#allocation12], %s320
        %s322 = sand.u32 %s142, 1
        %s323 = smul.addr %s322, 8
        %s324 = scalar_lea.vmem [#allocation11], %s323
        // Predicated region
        $region49: #{tpu_custom_call.1} parent=35 // pred_check
          %p325 = pneg %p155
        $region50: #{tpu_custom_call.1} parent=35 // pred_check_branch
          %327 = sbr.rel (%p325) target = $region52
        $region51: #{tpu_custom_call.1} parent=35 // pred_region
          %329 = dma.done %s321, 128
        $region52: #{tpu_custom_call.1} parent=35 // pred_fallthru
          _
        %s330 = sand.u32 %s56, 1
        %s331 = scalar_lea.sflag [#allocation6], %s330
        %s332 = sand.u32 %s56, 1
        %s333 = smul.addr %s332, 8
        %s334 = scalar_lea.vmem [#allocation5], %s333
        %p335 = pneg %p69
        %p336 = pneg %p66
        %s337 = sand.u32 %s27, 1
        %s338 = scalar_lea.sflag [#allocation9], %s337
        %s339 = sand.u32 %s84, 1
        %s340 = smul.addr %s339, 8
        %s341 = scalar_lea.vmem [#allocation8], %s340
        %p342 = pneg %p97
        %p343 = pneg %p94
        %s344 = sand.u32 %s27, 1
        %s345 = scalar_lea.sflag [#allocation9], %s344
        %s346 = sand.u32 %s112, 1
        %s347 = smul.addr %s346, 8
        %s348 = scalar_lea.vmem [#allocation10], %s347
        %p349 = pneg %p125
        %p350 = pneg %p122
        %s351 = sand.u32 %s142, 1
        %s352 = scalar_lea.sflag [#allocation12], %s351
        %s353 = sand.u32 %s142, 1
        %s354 = smul.addr %s353, 8
        %s355 = scalar_lea.vmem [#allocation11], %s354
        %p356 = pneg %p155
        %p357 = pneg %p152
        %p358 = pneg %p183
        %p359 = pneg %p180
        %s360 = sand.u32 %s170, 1
        %s361 = scalar_lea.sflag [#allocation7], %s360
        %s362 = sand.u32 %s170, 1
        %s363 = smul.addr %s362, 8
        %s364 = scalar_lea.vmem [#allocation13], %s363
        %p365 = scmp.eq.s32.totalorder %s34, 0
        // Predicated region
        $region53: #{tpu_custom_call.1} parent=35 // pred_check
          %p366 = pneg %p365
        $region54: #{tpu_custom_call.1} parent=35 // pred_check_branch
          %368 = sbr.rel (%p366) target = $region56
        $region55: #{tpu_custom_call.1} parent=35 // pred_region
          %vm369 = vcmask 7168
          %370 = vst.msk [vmem:[#allocation2] sm:$0xff] %vm369, -inf
          %371 = vst.msk [vmem:[#allocation3] sm:$0xff] %vm369, 0.0
          %vm372 = vcmask 261120
          %373 = vst.msk [vmem:[#allocation4] sm:$0xff] %vm372, 0.0
        $region56: #{tpu_custom_call.1} parent=35 // pred_fallthru
          _
        %v374 = vld [vmem:[%s294] sm:$0xff]
        %v375 = vld [vmem:[%s304] sm:$0xff]
        %vm376 = vcmask 261120
        %v378 = vsel %vm376, %v374, 0
        %v381 = vsel %vm376, %v375, 0
        %383 = vmatpush.xpose.msra.mxu0 0.0
        %384 = vmatpush.xpose.msra.mxu0 0.0
        %385 = vmatpush.xpose.msra.mxu0 0.0
        %386 = vmatpush.xpose.msra.mxu0 0.0
        %387 = vmatpush.xpose.msra.mxu0 0.0
        %388 = vmatpush.xpose.msra.mxu0 0.0
        %389 = vmatpush.xpose.msra.mxu0 0.0
        %390 = vmatpush.xpose.msra.mxu0 0.0
        %391 = vmatpush.xpose.msra.mxu0 0.0
        %392 = vmatpush.xpose.msra.mxu0 0.0
        %393 = vmatpush.xpose.msra.mxu0 0.0
        %394 = vmatpush.xpose.msra.mxu0 0.0
        %395 = vmatpush.xpose.msra.mxu0 0.0
        %396 = vmatpush.xpose.msra.mxu0 0.0
        %397 = vmatpush.xpose.msra.mxu0 0.0
        %398 = vmatpush.xpose.msra.mxu0 %v381
        %399 = vmatmul.f32.gmra.mxu0 %v378
        %v400 = vpop.f32.mrf.mxu0
        %v401 = vadd.f32 0.0, %v400
        %402 = vdwg.mxu0
        %v403 = vmul.f32 %v401, 0.17677669
        %v404 = vld [vmem:[%s324] sm:$0xff]
        %v405 = vsub.f32 1.0, %v404
        %v406 = vmul.f32 %v405, -1e+30
        %v407 = vadd.f32 %v403, %v406
        %v408 = vld [vmem:[#allocation2] sm:$0xff]
        %vm409 = vcmask 64512
        %v410 = vsel %vm409, %v407, -inf
        %411 = vmax.xlane.f32.xlu0 %v410
        %v412 = vpop.xlane.xlu0 %411
        %v413 = vmax.f32 %v408, %v412
        %v414 = vsub.f32 %v408, %v413
        %v415 = vmul.f32 %v414, 1.442695
        %v416 = vpow.pop %v415
        %418 = vset.pattern.permute.xlu0 0
        %419 = vperm.xlu0 %418, %v413
        %v420 = vpop.permute.xlu0 %419
        %v422 = vsub.f32 %v407, %v420
        %v423 = vmul.f32 %v422, 1.442695
        %v424 = vpow.pop %v423
        %v425 = vld [vmem:[#allocation3] sm:$0xff]
        %v426 = vmul.f32 %v416, %v425
        %v427 = vsel %vm409, %v424, 0.0
        %428 = vadd.xlane.f32.xlu0 %v427
        %v429 = vpop.xlane.xlu0 %428
        %v430 = vadd.f32 %v426, %v429
        %vm431 = vcmask 7168
        %432 = vst.msk [vmem:[#allocation3] sm:$0xff] %vm431, %v430
        %v433 = vld [vmem:[#allocation4] sm:$0xff]
        %435 = vset.pattern.permute.xlu0 0
        %436 = vperm.xlu0 %435, %v416
        %v437 = vpop.permute.xlu0 %436
        %v439 = vmul.f32 %v437, %v433
        %v440 = vld [vmem:[%s314] sm:$0xff]
        %v442 = vsel %vm409, %v424, 0
        %444 = vmatpush.msra.mxu0 0.0
        %445 = vmatpush.msra.mxu0 0.0
        %446 = vmatpush.msra.mxu0 0.0
        %447 = vmatpush.msra.mxu0 0.0
        %448 = vmatpush.msra.mxu0 0.0
        %449 = vmatpush.msra.mxu0 0.0
        %450 = vmatpush.msra.mxu0 0.0
        %451 = vmatpush.msra.mxu0 0.0
        %452 = vmatpush.msra.mxu0 0.0
        %453 = vmatpush.msra.mxu0 0.0
        %454 = vmatpush.msra.mxu0 0.0
        %455 = vmatpush.msra.mxu0 0.0
        %456 = vmatpush.msra.mxu0 0.0
        %457 = vmatpush.msra.mxu0 0.0
        %458 = vmatpush.msra.mxu0 0.0
        %459 = vmatpush.msra.mxu0 %v440
        %460 = vmatmul.f32.gmra.mxu0 %v442
        %v461 = vpop.f32.mrf.mxu0
        %v462 = vadd.f32 0.0, %v461
        %463 = vdwg.mxu0
        %v464 = vadd.f32 %v439, %v462
        %465 = vst.msk [vmem:[#allocation4] sm:$0xff] %vm376, %v464
        %466 = vst.msk [vmem:[#allocation2] sm:$0xff] %vm431, %v413
        // Predicated region
        $region57: #{tpu_custom_call.1} parent=35 // pred_check
          %p467 = pneg %p365
        $region58: #{tpu_custom_call.1} parent=35 // pred_check_branch
          %469 = sbr.rel (%p467) target = $region60
        $region59: #{tpu_custom_call.1} parent=35 // pred_region
          %v470 = vld [vmem:[#allocation4] sm:$0xff]
          %v471 = vld [vmem:[#allocation3] sm:$0xff]
          %473 = vset.pattern.permute.xlu0 0
          %474 = vperm.xlu0 %473, %v471
          %v475 = vpop.permute.xlu0 %474
          %v477 = vrcp.pop %v475
          %v478 = vmul.f32 %v475, %v477
          %v479 = vsub.f32 1.0, %v478
          %v480 = vmul.f32 %v477, %v479
          %v481 = vadd.f32 %v477, %v480
          %vm482 = vweird.f32 %v475
          %vm483 = vweird.f32 %v477
          %vm484 = vmor %vm482, %vm483
          %v485 = vsel %vm484, %v477, %v481
          %v486 = vand.u32 2147483647, %v475
          %vm487 = vcmp.eq.f32.partialorder %v486, 8.507059e+37
          %v488 = vand.u32 %v475, 2147483648
          %v489 = vor.u32 1.1754944e-38, %v488
          %v490 = vsel %vm487, %v489, %v485
          %v491 = vmul.f32 %v470, %v490
          %492 = vst.msk [vmem:[%s364] sm:$0xff] %vm376, %v491
        $region60: #{tpu_custom_call.1} parent=35 // pred_fallthru
          _
        %s493 = sand.u32 %s170, 1
        %s494 = scalar_lea.sflag [#allocation7], %s493
        %s495 = sand.u32 %s170, 1
        %s496 = smul.addr %s495, 8
        %s497 = scalar_lea.vmem [#allocation13], %s496
        // Predicated region
        $region61: #{tpu_custom_call.1} parent=35 // pred_check
          %p498 = pneg %p180
        $region62: #{tpu_custom_call.1} parent=35 // pred_check_branch
          %500 = sbr.rel (%p498) target = $region64
        $region63: #{tpu_custom_call.1} parent=35 // pred_region
          %502 = vsyncadd %s494, 0
          %s503 = sadd.s32 %s33, %s32
          %s504 = smul.addr %s503, 8
          %s505 = scalar_lea.hbm %s4, %s504
          %s507 = sshll.u32 %s497, 4
          %s508 = int_to_ptr.vmem [resolvable:$true] %s507
          %s509 = sshll.u32 %s505, 4
          %s510 = int_to_ptr.hbm [resolvable:$true] %s509
          %512 = dma.vmem_to_hbm [thread:$0]  %s508, 128, %s510, %s494
        $region64: #{tpu_custom_call.1} parent=35 // pred_fallthru
          _
      $region36: #{tpu_custom_call.1} parent=5 // pred_fallthru
        _
      %p513 = scmp.le.s32.totalorder 2, %s22
      // Predicated region
      $region65: #{tpu_custom_call.1} parent=5 // pred_check
        %p514 = pneg %p513
      $region66: #{tpu_custom_call.1} parent=5 // pred_check_branch
        %516 = sbr.rel (%p514) target = $region68
      $region67: #{tpu_custom_call.1} parent=5 // pred_region
        %s517 = ssub.s32 %s22, 2
        // Predicated region
        $region69: #{tpu_custom_call.1} parent=67 // pred_check
          %p518 = pneg %p186
        $region70: #{tpu_custom_call.1} parent=67 // pred_check_branch
          %520 = sbr.rel (%p518) target = $region72
        $region71: #{tpu_custom_call.1} parent=67 // pred_region
          %s521 = sand.u32 %s171, 1
          %s522 = scalar_lea.sflag [#allocation7], %s521
          %s523 = sand.u32 %s171, 1
          %s524 = smul.addr %s523, 8
          %s525 = scalar_lea.vmem [#allocation13], %s524
          %527 = dma.done %s522, 128
        $region72: #{tpu_custom_call.1} parent=67 // pred_fallthru
          _
      $region68: #{tpu_custom_call.1} parent=5 // pred_fallthru
        _
    $region6: #{tpu_custom_call.1} parent=1 // loop_footer
      %s26 = sadd.s32 1, %s22
    $region7: #{tpu_custom_call.1} parent=1 // loop_footer_branch
      %21 = sbr.rel target = $region3
    $region8: #{tpu_custom_call.1} parent=1 // loop_exit
      _
    %528 = vsyncpa [#allocation6], 1
    %s529 = scalar_lea.sflag [#allocation6], 1
    %530 = vsyncpa %s529, 1
    %531 = vsyncpa [#allocation9], 1
    %s532 = scalar_lea.sflag [#allocation9], 1
    %533 = vsyncpa %s532, 1
    %534 = vsyncpa [#allocation12], 1
    %s535 = scalar_lea.sflag [#allocation12], 1
    %536 = vsyncpa %s535, 1
    %537 = vsyncpa [#allocation7], 1
    %s538 = scalar_lea.sflag [#allocation7], 1
    %539 = vsyncpa %s538, 1

</llo_original>
